<compile_context>
chip_gen: v7x
topology: tpu7x:2x2x1
jax: 0.10.0
libtpu: 0.0.40
codegen_flags: <defaults>
</compile_context>

<pallas_src>
import math

import jax
import jax.numpy as jnp
from jax.experimental import pallas as pl
from jax.experimental.pallas import tpu as pltpu


def _round_up(x: int, m: int) -> int:
    return ((x + m - 1) // m) * m


def _fused_qkv_kernel(x_ref, w_ref, b_ref, o_ref, acc_ref):
    """One (tm, tn) tile of  x @ [W_q | W_kv] + [b_q | b_kv], K-tiled reduction."""

    @pl.when(pl.program_id(2) == 0)
    def _init():
        acc_ref[...] = jnp.zeros_like(acc_ref)

    # MXU matmul with f32 accumulation (operands may be bf16).
    acc_ref[...] += jnp.dot(
        x_ref[...], w_ref[...], preferred_element_type=jnp.float32
    )

    @pl.when(pl.program_id(2) == pl.num_programs(2) - 1)
    def _finalize():
        o_ref[...] = (acc_ref[...] + b_ref[...]).astype(o_ref.dtype)


def mqa_qkv_projection(
    hidden_states,   # (B, S, H)
    wq_t,            # (H, H)           q_attn weight, pre-transposed (in, out)
    bq,              # (H,)
    wkv_t,           # (H, 2*head_dim)  kv_attn weight, pre-transposed (in, out)
    bkv,             # (2*head_dim,)
    *,
    tile_m: int = 256,
    tile_n: int = 256,
    tile_k: int = 512,
    compute_dtype=None,   # dtype fed to the MXU (e.g. jnp.bfloat16); accumulation is f32
):
    B, S, H = hidden_states.shape
    KV = wkv_t.shape[1]
    head_dim = KV // 2
    out_dtype = hidden_states.dtype
    if compute_dtype is None:
        compute_dtype = hidden_states.dtype
    compute_dtype = jnp.dtype(compute_dtype)

    M = B * S
    K = H
    N = H + KV  # fused output width (query columns then key/value columns)

    # Tile sizes: sublane (second-last) dims multiples of 16 (safe for f32 & bf16),
    # lane (last) dims multiples of 128 — or the full (padded) extent.
    tm = _round_up(min(tile_m, _round_up(M, 16)), 16)
    tn = _round_up(min(tile_n, _round_up(N, 128)), 128)
    tk = _round_up(min(tile_k, _round_up(K, 128)), 128)

    Mp = _round_up(M, tm)
    Np = _round_up(N, tn)
    Kp = _round_up(K, tk)

    # Fused + zero-padded operands (padded K contributes 0; padded N is sliced off).
    x2d = hidden_states.reshape(M, H).astype(compute_dtype)
    w_fused = jnp.concatenate([wq_t, wkv_t], axis=1).astype(compute_dtype)       # (K, N)
    b_fused = jnp.concatenate([bq, bkv], axis=0).astype(jnp.float32).reshape(1, N)

    x_p = jnp.pad(x2d, ((0, Mp - M), (0, Kp - K)))
    w_p = jnp.pad(w_fused, ((0, Kp - K), (0, Np - N)))
    b_p = jnp.pad(b_fused, ((0, 0), (0, Np - N)))

    grid = (Mp // tm, Np // tn, Kp // tk)

    c_bytes = compute_dtype.itemsize
    o_bytes = jnp.dtype(out_dtype).itemsize
    cost = pl.CostEstimate(
        flops=2 * Mp * Kp * Np,
        transcendentals=0,
        bytes_accessed=(Mp * Kp + Kp * Np) * c_bytes + Np * 4 + Mp * Np * o_bytes,
    )

    out_p = pl.pallas_call(
        _fused_qkv_kernel,
        out_shape=jax.ShapeDtypeStruct((Mp, Np), out_dtype),
        grid_spec=pltpu.PrefetchScalarGridSpec(
            num_scalar_prefetch=0,
            grid=grid,
            in_specs=[
                pl.BlockSpec((tm, tk), lambda i, j, k: (i, k)),   # activations tile
                pl.BlockSpec((tk, tn), lambda i, j, k: (k, j)),   # fused weight tile
                pl.BlockSpec((1, tn), lambda i, j, k: (0, j)),    # fused bias tile
            ],
            out_specs=pl.BlockSpec((tm, tn), lambda i, j, k: (i, j)),
            scratch_shapes=[pltpu.VMEM((tm, tn), jnp.float32)],
        ),
        compiler_params=pltpu.CompilerParams(
            dimension_semantics=("parallel", "parallel", "arbitrary"),
            vmem_limit_bytes=32 * 1024 * 1024,
        ),
        cost_estimate=cost,
    )(x_p, w_p, b_p)

    # Strip padding and split fused output back into query / key / value.
    query = out_p[:M, :H].reshape(B, S, H)
    kv = out_p[:M, H:H + KV]
    key = kv[:, :head_dim].reshape(B, S, head_dim)
    value = kv[:, head_dim:].reshape(B, S, head_dim)
    return query, key, value


if __name__ == "__main__":
    # Module config (TP world size = 1).
    hidden_size = 256
    num_attention_heads = 2
    head_dim = hidden_size // num_attention_heads   # 128
    num_layers = 4
    m_width = 1.0
    initializer_range = 0.02
    add_bias = True

    # _get_std_for_linear(initializer_range, "normal", m_width) == initializer_range / m_width
    std_q = initializer_range / m_width
    std_kv = std_q / math.sqrt(2 * num_layers)

    B, S = 2, 8
    root = jax.random.PRNGKey(0)
    k_x, k_wq, k_bq, k_wkv, k_bkv = jax.random.split(root, 5)

    hidden_states = jax.random.normal(k_x, (B, S, hidden_size), dtype=jnp.float32)

    # Deterministic synthetic parameters (nn.Linear weight is (out, in); stored transposed).
    wq_t = std_q * jax.random.normal(k_wq, (hidden_size, hidden_size), dtype=jnp.float32)
    bq = (std_q * jax.random.normal(k_bq, (hidden_size,), dtype=jnp.float32)
          if add_bias else jnp.zeros((hidden_size,), jnp.float32))
    wkv_t = std_kv * jax.random.normal(k_wkv, (hidden_size, 2 * head_dim), dtype=jnp.float32)
    bkv = (std_kv * jax.random.normal(k_bkv, (2 * head_dim,), dtype=jnp.float32)
           if add_bias else jnp.zeros((2 * head_dim,), jnp.float32))

    # Plain-JAX reference (f32).
    x2d = hidden_states.reshape(-1, hidden_size)
    q_ref = (x2d @ wq_t + bq).reshape(B, S, hidden_size)
    kv_ref = (x2d @ wkv_t + bkv).reshape(B, S, 2 * head_dim)
    k_ref, v_ref = kv_ref[..., :head_dim], kv_ref[..., head_dim:]

    # 1) f32-operand path (bit-accurate-ish vs reference).
    query, key, value = mqa_qkv_projection(hidden_states, wq_t, bq, wkv_t, bkv)
    jax.block_until_ready((query, key, value))

    assert query.shape == (B, S, hidden_size)
    assert key.shape == (B, S, head_dim)
    assert value.shape == (B, S, head_dim)
    assert jnp.allclose(query, q_ref, atol=1e-4, rtol=1e-4)
    assert jnp.allclose(key, k_ref, atol=1e-4, rtol=1e-4)
    assert jnp.allclose(value, v_ref, atol=1e-4, rtol=1e-4)

    # 2) bf16-operand path (MXU-friendly on v5e/v6e/v7x; f32 accumulation inside kernel).
    qb, kb, vb = mqa_qkv_projection(
        hidden_states, wq_t, bq, wkv_t, bkv, compute_dtype=jnp.bfloat16
    )
    jax.block_until_ready((qb, kb, vb))
    assert jnp.allclose(qb.astype(jnp.float32), q_ref, atol=3e-2, rtol=3e-2)
    assert jnp.allclose(kb.astype(jnp.float32), k_ref, atol=3e-2, rtol=3e-2)
    assert jnp.allclose(vb.astype(jnp.float32), v_ref, atol=3e-2, rtol=3e-2)

    # TODO(synk): tensor-parallel sharding (ColumnParallelLinear) / sequence-parallel
    # collectives are not modeled; this implements the tp_world_size == 1 forward.
    print("KERNEL_OK")
</pallas_src>

<mosaic_0001>
module attributes {stable_mosaic.version = 11 : i64} {
  func.func @_fused_qkv_kernel(%arg0: i32, %arg1: i32, %arg2: i32, %arg3: memref<16x256xf32, #tpu.memory_space<vmem>>, %arg4: memref<256x256xf32, #tpu.memory_space<vmem>>, %arg5: memref<1x256xf32, #tpu.memory_space<vmem>>, %arg6: memref<16x256xf32, #tpu.memory_space<vmem>>, %arg7: memref<16x256xf32, #tpu.memory_space<vmem>>) attributes {dimension_semantics = [#tpu.dimension_semantics<parallel>, #tpu.dimension_semantics<parallel>, #tpu.dimension_semantics<arbitrary>], iteration_bounds = array<i64: 1, 2, 1>, scalar_prefetch = 0 : i64, scratch_operands = 1 : i64, tpu.core_type = #tpu.core_type<tc>, window_params = [{transform_indices = @transform_0, window_bounds = array<i64: 16, 256>}, {transform_indices = @transform_1, window_bounds = array<i64: 256, 256>}, {transform_indices = @transform_2, window_bounds = array<i64: 1, 256>}, {transform_indices = @transform_3, window_bounds = array<i64: 16, 256>}]} {
    %c0_i32 = arith.constant 0 : i32
    %0 = arith.cmpi eq, %arg2, %c0_i32 : i32
    %1 = arith.extui %0 : i1 to i32
    %c0_i32_0 = arith.constant 0 : i32
    %2 = arith.cmpi ne, %1, %c0_i32_0 : i32
    scf.if %2 {
      %cst_10 = arith.constant 0.000000e+00 : f32
      %12 = vector.broadcast %cst_10 : f32 to vector<16x256xf32>
      %c0_11 = arith.constant 0 : index
      %c0_12 = arith.constant 0 : index
      %13 = vector.load %arg7[%c0_11, %c0_12] : memref<16x256xf32, #tpu.memory_space<vmem>>, vector<16x256xf32>
      tpu.vector_store %arg7[%c0_11, %c0_12], %12 {strides = array<i32>} : memref<16x256xf32, #tpu.memory_space<vmem>>, vector<16x256xf32>,
    } else {
    }
    %c0 = arith.constant 0 : index
    %c0_1 = arith.constant 0 : index
    %3 = vector.load %arg7[%c0, %c0_1] : memref<16x256xf32, #tpu.memory_space<vmem>>, vector<16x256xf32>
    %c0_2 = arith.constant 0 : index
    %c0_3 = arith.constant 0 : index
    %4 = vector.load %arg3[%c0_2, %c0_3] : memref<16x256xf32, #tpu.memory_space<vmem>>, vector<16x256xf32>
    %c0_4 = arith.constant 0 : index
    %c0_5 = arith.constant 0 : index
    %5 = vector.load %arg4[%c0_4, %c0_5] : memref<256x256xf32, #tpu.memory_space<vmem>>, vector<256x256xf32>
    %cst = arith.constant dense<0.000000e+00> : vector<16x256xf32>
    %6 = tpu.matmul %4, %5, %cst {dimension_numbers = #tpu.dot_dimension_numbers<[1], [0], [0], [1], [0, 0, 1, 1], [], []>} : vector<16x256xf32>, vector<256x256xf32>, vector<16x256xf32> -> vector<16x256xf32>
    %7 = arith.addf %3, %6 : vector<16x256xf32>
    %c0_6 = arith.constant 0 : index
    %c0_7 = arith.constant 0 : index
    %8 = vector.load %arg7[%c0_6, %c0_7] : memref<16x256xf32, #tpu.memory_space<vmem>>, vector<16x256xf32>
    tpu.vector_store %arg7[%c0_6, %c0_7], %7 {strides = array<i32>} : memref<16x256xf32, #tpu.memory_space<vmem>>, vector<16x256xf32>,
    %c0_i32_8 = arith.constant 0 : i32
    %9 = arith.cmpi eq, %arg2, %c0_i32_8 : i32
    %10 = arith.extui %9 : i1 to i32
    %c0_i32_9 = arith.constant 0 : i32
    %11 = arith.cmpi ne, %10, %c0_i32_9 : i32
    scf.if %11 {
      %c0_10 = arith.constant 0 : index
      %c0_11 = arith.constant 0 : index
      %12 = vector.load %arg7[%c0_10, %c0_11] : memref<16x256xf32, #tpu.memory_space<vmem>>, vector<16x256xf32>
      %c0_12 = arith.constant 0 : index
      %c0_13 = arith.constant 0 : index
      %13 = vector.load %arg5[%c0_12, %c0_13] : memref<1x256xf32, #tpu.memory_space<vmem>>, vector<1x256xf32>
      %14 = vector.broadcast %13 : vector<1x256xf32> to vector<16x256xf32>
      %15 = arith.addf %12, %14 : vector<16x256xf32>
      %c0_14 = arith.constant 0 : index
      %c0_15 = arith.constant 0 : index
      %16 = vector.load %arg6[%c0_14, %c0_15] : memref<16x256xf32, #tpu.memory_space<vmem>>, vector<16x256xf32>
      tpu.vector_store %arg6[%c0_14, %c0_15], %15 {strides = array<i32>} : memref<16x256xf32, #tpu.memory_space<vmem>>, vector<16x256xf32>,
    } else {
    }
    return
  }
  func.func @transform_0(%arg0: i32, %arg1: i32, %arg2: i32) -> (i32, i32) {
    %c0_i32 = arith.constant 0 : i32
    return %arg0, %arg2 : i32, i32
  }
  func.func @transform_1(%arg0: i32, %arg1: i32, %arg2: i32) -> (i32, i32) {
    %c0_i32 = arith.constant 0 : i32
    return %arg2, %arg1 : i32, i32
  }
  func.func @transform_2(%arg0: i32, %arg1: i32, %arg2: i32) -> (i32, i32) {
    %c0_i32 = arith.constant 0 : i32
    %c0_i32_0 = arith.constant 0 : i32
    return %c0_i32, %arg1 : i32, i32
  }
  func.func @transform_3(%arg0: i32, %arg1: i32, %arg2: i32) -> (i32, i32) {
    %c0_i32 = arith.constant 0 : i32
    return %arg0, %arg1 : i32, i32
  }
}

</mosaic_0001>

<llo_original>
// kernel: tpu_custom_call.1
$region0: #{tpu_custom_call.1}
  #allocation0 [shape = 'u32[]', space=smem, size = 0x4, offset = 0x4, fixed_abs, tag = 'smem constant byte address 0x4 - core index']
  #allocation1 [shape = 'u32[144,128]{1,0:T(1,128)}', space=vmem, size = 0x12000, scoped, tag = 'internal scratch']
  #allocation2 [shape = 'f32[16,256]{1,0:T(8,128)}', space=vmem, size = 0x4000, scoped, tag = 'scratch operand']
  %s0 = inlined_call_operand.hbm [shape: f32[16,256], index: 0, kind: input, shape index: {}]
  %s1 = inlined_call_operand.hbm [shape: f32[256,512], index: 1, kind: input, shape index: {}]
  %s2 = inlined_call_operand.vmem [shape: f32[1,512], index: 2, kind: input, shape index: {}]
  %s3 = inlined_call_operand.hbm [shape: f32[16,512], index: 3, kind: output, shape index: {}]
  %s4 = sld [smem:[#allocation0]]
  $region61: #{tpu_custom_call.1} parent=0
    _
  %s6 = ssub.s32 1, %s4
  %s7 = scalar_select 0, %s6, %s4
  $region1: #{tpu_custom_call.1} parent=0
    #allocation3 [shape = 'u8[16384]{0}', space=vmem, size = 0x4000, scoped, tag = 'input window, operand 0, single buffered']
    #allocation4 [shape = 's32[2]{0}', space=sflag, size = 0x8, scoped, tag = 'scoped memory for tpu_custom_call.1']
    #allocation5 [shape = 's32[2]{0}', space=sflag, size = 0x8, scoped, tag = 'scoped memory for tpu_custom_call.1']
    #allocation6 [shape = 'u8[524288]{0}', space=vmem, size = 0x80000, scoped, tag = 'input window, operand 1']
    #allocation7 [shape = 's32[2]{0}', space=sflag, size = 0x8, scoped, tag = 'scoped memory for tpu_custom_call.1']
    #allocation8 [shape = 'u8[32768]{0}', space=vmem, size = 0x8000, scoped, tag = 'output window, operand 0']
    %8 = vsyncpa [#allocation4], 0
    %9 = vsyncpa [#allocation7], 0
    %s10 = scalar_lea.sflag [#allocation7], 1
    %11 = vsyncpa %s10, 0
    %12 = vsyncpa [#allocation5], 0
    %s13 = scalar_lea.sflag [#allocation5], 1
    %14 = vsyncpa %s13, 0
    loop: start=0, step=1, limit=4
    $region2: #{tpu_custom_call.1} parent=1 // loop_pre_header
      _
    $region3: #{tpu_custom_call.1} parent=1 // loop_header
      %s16 = sphi 0, %s20
      %p17 = scmp.ge.s32.totalorder %s16, 4
      %s23 = sphi 0, %s42
      %s24 = sphi 0, %s38
      %s25 = sphi 0, %s34
      %s26 = sphi 0, %s23
      %s27 = sphi 0, %s24
      %s28 = sphi 0, %s25
      %s29 = sphi 0, %s26
      %s30 = sphi 0, %s27
      %s31 = sphi 0, %s28
      %s47 = sphi 0, %s49
      %s50 = sphi 0, %s47
      %s51 = sphi 0, %s50
      %s67 = sphi 0, %s51
      %s75 = sphi 0, %s77
      %s78 = sphi 0, %s75
      %s79 = sphi 0, %s78
      %s95 = sphi 0, %s79
      %s101 = sphi 0, %s103
      %s104 = sphi 0, %s101
      %s105 = sphi 0, %s104
      %s121 = sphi 0, %s105
      %s129 = sphi 0, %s131
      %s132 = sphi 0, %s129
      %s133 = sphi 0, %s132
      %s149 = sphi 0, %s133
    $region4: #{tpu_custom_call.1} parent=1 // loop_header_branch
      %19 = sbr.rel (%p17) target = $region8
    $region5: #{tpu_custom_call.1} parent=1 // loop_body
      %s21 = ssub.s32 %s16, 1
      %s22 = ssub.s32 %s16, 2
      %s32 = sadd.s32 1, %s25
      %p33 = scmp.ge.s32.totalorder %s32, 1
      %s34 = scalar_select %p33, 0, %s32
      %s35 = sadd.s32 1, %s24
      %s36 = scalar_select %p33, %s35, %s24
      %p37 = scmp.ge.s32.totalorder %s36, 2
      %s38 = scalar_select %p37, 0, %s36
      %s39 = sadd.s32 1, %s23
      %s40 = scalar_select %p37, %s39, %s23
      %p41 = scmp.ge.s32.totalorder %s40, 1
      %s42 = scalar_select %p41, 0, %s40
      %s43 = ssub.s32 %s23, %s42
      %s44 = ssub.s32 %s25, %s34
      %s45 = sor.u32 %s43, %s44
      %p46 = scmp.eq.s32.totalorder %s45, 0
      %s48 = sadd.s32 %s47, 1
      %s49 = scalar_select %p46, %s47, %s48
      %p52 = pneg %p46
      %p53 = scmp.eq.s32.totalorder %s16, 1
      %p54 = por %p52, %p53
      %p55 = scmp.ne.s32.totalorder %s47, %s50
      %p56 = scmp.eq.s32.totalorder %s16, 0
      %p57 = por %p55, %p56
      %p58 = scmp.ne.s32.totalorder %s47, %s50
      %p59 = scmp.eq.s32.totalorder %s21, 1
      %p60 = por %p58, %p59
      %p61 = scmp.ne.s32.totalorder %s50, %s51
      %p62 = scmp.eq.s32.totalorder %s21, 0
      %p63 = por %p61, %p62
      %p64 = scmp.ne.s32.totalorder %s50, %s51
      %p65 = scmp.eq.s32.totalorder %s22, 1
      %p66 = por %p64, %p65
      %p68 = scmp.ne.s32.totalorder %s51, %s67
      %p69 = scmp.eq.s32.totalorder %s22, 0
      %p70 = por %p68, %p69
      %s71 = ssub.s32 %s25, %s34
      %s72 = ssub.s32 %s24, %s38
      %s73 = sor.u32 %s71, %s72
      %p74 = scmp.eq.s32.totalorder %s73, 0
      %s76 = sadd.s32 %s75, 1
      %s77 = scalar_select %p74, %s75, %s76
      %p80 = pneg %p74
      %p81 = scmp.eq.s32.totalorder %s16, 1
      %p82 = por %p80, %p81
      %p83 = scmp.ne.s32.totalorder %s75, %s78
      %p84 = scmp.eq.s32.totalorder %s16, 0
      %p85 = por %p83, %p84
      %p86 = scmp.ne.s32.totalorder %s75, %s78
      %p87 = scmp.eq.s32.totalorder %s21, 1
      %p88 = por %p86, %p87
      %p89 = scmp.ne.s32.totalorder %s78, %s79
      %p90 = scmp.eq.s32.totalorder %s21, 0
      %p91 = por %p89, %p90
      %p92 = scmp.ne.s32.totalorder %s78, %s79
      %p93 = scmp.eq.s32.totalorder %s22, 1
      %p94 = por %p92, %p93
      %p96 = scmp.ne.s32.totalorder %s79, %s95
      %p97 = scmp.eq.s32.totalorder %s22, 0
      %p98 = por %p96, %p97
      %s99 = ssub.s32 %s24, %s38
      %p100 = scmp.eq.s32.totalorder %s99, 0
      %s102 = sadd.s32 %s101, 1
      %s103 = scalar_select %p100, %s101, %s102
      %p106 = pneg %p100
      %p107 = scmp.eq.s32.totalorder %s16, 1
      %p108 = por %p106, %p107
      %p109 = scmp.ne.s32.totalorder %s101, %s104
      %p110 = scmp.eq.s32.totalorder %s16, 0
      %p111 = por %p109, %p110
      %p112 = scmp.ne.s32.totalorder %s101, %s104
      %p113 = scmp.eq.s32.totalorder %s21, 1
      %p114 = por %p112, %p113
      %p115 = scmp.ne.s32.totalorder %s104, %s105
      %p116 = scmp.eq.s32.totalorder %s21, 0
      %p117 = por %p115, %p116
      %p118 = scmp.ne.s32.totalorder %s104, %s105
      %p119 = scmp.eq.s32.totalorder %s22, 1
      %p120 = por %p118, %p119
      %p122 = scmp.ne.s32.totalorder %s105, %s121
      %p123 = scmp.eq.s32.totalorder %s22, 0
      %p124 = por %p122, %p123
      %s125 = ssub.s32 %s23, %s42
      %s126 = ssub.s32 %s24, %s38
      %s127 = sor.u32 %s125, %s126
      %p128 = scmp.eq.s32.totalorder %s127, 0
      %s130 = sadd.s32 %s129, 1
      %s131 = scalar_select %p128, %s129, %s130
      %p134 = pneg %p128
      %p135 = scmp.eq.s32.totalorder %s16, 1
      %p136 = por %p134, %p135
      %p137 = scmp.ne.s32.totalorder %s129, %s132
      %p138 = scmp.eq.s32.totalorder %s16, 0
      %p139 = por %p137, %p138
      %p140 = scmp.ne.s32.totalorder %s129, %s132
      %p141 = scmp.eq.s32.totalorder %s21, 1
      %p142 = por %p140, %p141
      %p143 = scmp.ne.s32.totalorder %s132, %s133
      %p144 = scmp.eq.s32.totalorder %s21, 0
      %p145 = por %p143, %p144
      %p146 = scmp.ne.s32.totalorder %s132, %s133
      %p147 = scmp.eq.s32.totalorder %s22, 1
      %p148 = por %p146, %p147
      %p150 = scmp.ne.s32.totalorder %s133, %s149
      %p151 = scmp.eq.s32.totalorder %s22, 0
      %p152 = por %p150, %p151
      %p153 = scmp.le.s32.totalorder 1, %s16
      %p154 = scmp.lt.s32.totalorder %s16, 3
      %p155 = pnand %p153, %p154
      %p156 = pneg %p155
      // Predicated region
      $region9: #{tpu_custom_call.1} parent=5 // pred_check
        _
      $region10: #{tpu_custom_call.1} parent=5 // pred_check_branch
        %158 = sbr.rel (%p155) target = $region12
      $region11: #{tpu_custom_call.1} parent=5 // pred_region
        %s159 = ssub.s32 %s16, 1
        // Predicated region
        $region13: #{tpu_custom_call.1} parent=11 // pred_check
          %p160 = pneg %p63
        $region14: #{tpu_custom_call.1} parent=11 // pred_check_branch
          %162 = sbr.rel (%p160) target = $region16
        $region15: #{tpu_custom_call.1} parent=11 // pred_region
          %s163 = smul.u32 2, %s26
          %s164 = smul.u32 2, %s28
          %s166 = ssub.s32 512, 512
          %167 = vsyncadd [#allocation4], %s166
          %s168 = smul.addr %s163, 2
          %s169 = sadd.s32 %s164, %s168
          %s170 = smul.addr %s169, 128
          %s171 = scalar_lea.hbm %s0, %s170
          %s172 = sshll.u32 [#allocation3], 4
          %s173 = int_to_ptr.vmem [resolvable:$true] %s172
          %178 = dma.hbm_to_vmem [thread:$0]  %s171, 512, %s173, [#allocation4], 256, 256, 16
        $region16: #{tpu_custom_call.1} parent=11 // pred_fallthru
          _
      $region12: #{tpu_custom_call.1} parent=5 // pred_fallthru
        _
      %p179 = scmp.lt.s32.totalorder %s16, 2
      // Predicated region
      $region17: #{tpu_custom_call.1} parent=5 // pred_check
        %p180 = pneg %p179
      $region18: #{tpu_custom_call.1} parent=5 // pred_check_branch
        %182 = sbr.rel (%p180) target = $region20
      $region19: #{tpu_custom_call.1} parent=5 // pred_region
        // Predicated region
        $region21: #{tpu_custom_call.1} parent=19 // pred_check
          %p183 = pneg %p85
        $region22: #{tpu_custom_call.1} parent=19 // pred_check_branch
          %185 = sbr.rel (%p183) target = $region24
        $region23: #{tpu_custom_call.1} parent=19 // pred_region
          %s186 = sand.u32 %s75, 1
          %s187 = scalar_lea.sflag [#allocation7], %s186
          %s188 = sand.u32 %s75, 1
          %s189 = smul.addr %s188, 512
          %s190 = scalar_lea.vmem [#allocation6], %s189
          %s191 = smul.u32 32, %s25
          %s192 = smul.u32 2, %s24
          %s194 = ssub.s32 8192, 8192
          %195 = vsyncadd %s187, %s194
          %s196 = smul.addr %s191, 4
          %s197 = sadd.s32 %s192, %s196
          %s198 = smul.addr %s197, 128
          %s199 = scalar_lea.hbm %s1, %s198
          %s200 = sshll.u32 %s190, 4
          %s201 = int_to_ptr.vmem [resolvable:$true] %s200
          %206 = dma.hbm_to_vmem [thread:$0]  %s199, 8192, %s201, %s187, 512, 256, 16
        $region24: #{tpu_custom_call.1} parent=19 // pred_fallthru
          _
        // Predicated region
        $region25: #{tpu_custom_call.1} parent=19 // pred_check
          %p207 = pneg %p111
        $region26: #{tpu_custom_call.1} parent=19 // pred_check_branch
          %209 = sbr.rel (%p207) target = $region28
        $region27: #{tpu_custom_call.1} parent=19 // pred_region
          %s210 = smul.u32 2, %s24
          %p211 = scmp.lt.s32.totalorder %s210, 3
          %s212 = scalar_select %p211, %s210, 3
          %s213 = scalar_lea.vmem %s2, %s212
          %s214 = smul.u32 2, %s24
        $region28: #{tpu_custom_call.1} parent=19 // pred_fallthru
          _
      $region20: #{tpu_custom_call.1} parent=5 // pred_fallthru
        _
      %p215 = scmp.le.s32.totalorder 1, %s16
      %p216 = scmp.lt.s32.totalorder %s16, 3
      %p217 = pnand %p215, %p216
      %p218 = pneg %p217
      // Predicated region
      $region29: #{tpu_custom_call.1} parent=5 // pred_check
        _
      $region30: #{tpu_custom_call.1} parent=5 // pred_check_branch
        %220 = sbr.rel (%p217) target = $region32
      $region31: #{tpu_custom_call.1} parent=5 // pred_region
        %s221 = ssub.s32 %s16, 1
        // Predicated region
        $region33: #{tpu_custom_call.1} parent=31 // pred_check
          %p222 = pneg %p63
        $region34: #{tpu_custom_call.1} parent=31 // pred_check_branch
          %224 = sbr.rel (%p222) target = $region36
        $region35: #{tpu_custom_call.1} parent=31 // pred_region
          %225 = dma.done [#allocation4], 512
        $region36: #{tpu_custom_call.1} parent=31 // pred_fallthru
          _
        %s226 = sand.u32 %s78, 1
        %s227 = scalar_lea.sflag [#allocation7], %s226
        %s228 = sand.u32 %s78, 1
        %s229 = smul.addr %s228, 512
        %s230 = scalar_lea.vmem [#allocation6], %s229
        // Predicated region
        $region37: #{tpu_custom_call.1} parent=31 // pred_check
          %p231 = pneg %p91
        $region38: #{tpu_custom_call.1} parent=31 // pred_check_branch
          %233 = sbr.rel (%p231) target = $region40
        $region39: #{tpu_custom_call.1} parent=31 // pred_region
          %234 = dma.done %s227, 8192
        $region40: #{tpu_custom_call.1} parent=31 // pred_fallthru
          _
        %p235 = pneg %p63
        %p236 = pneg %p60
        %s237 = sand.u32 %s78, 1
        %s238 = scalar_lea.sflag [#allocation7], %s237
        %s239 = sand.u32 %s78, 1
        %s240 = smul.addr %s239, 512
        %s241 = scalar_lea.vmem [#allocation6], %s240
        %p242 = pneg %p91
        %p243 = pneg %p88
        %s244 = smul.u32 2, %s27
        %p245 = scmp.lt.s32.totalorder %s244, 3
        %s246 = scalar_select %p245, %s244, 3
        %s247 = scalar_lea.vmem %s2, %s246
        %p248 = pneg %p117
        %p249 = pneg %p114
        %p250 = pneg %p145
        %p251 = pneg %p142
        %s252 = sand.u32 %s132, 1
        %s253 = scalar_lea.sflag [#allocation5], %s252
        %s254 = sand.u32 %s132, 1
        %s255 = smul.addr %s254, 32
        %s256 = scalar_lea.vmem [#allocation8], %s255
        %s257 = smul.u32 2, %s26
        %s258 = smul.u32 2, %s28
        %s259 = smul.u32 32, %s28
        %s260 = smul.u32 2, %s27
        %s261 = smul.u32 2, %s27
        %p262 = scmp.lt.s32.totalorder %s261, 3
        %s263 = scalar_select %p262, %s261, 3
        %s264 = scalar_lea.vmem %s2, %s263
        %s265 = smul.u32 2, %s27
        %s266 = smul.u32 2, %s26
        %s267 = smul.u32 2, %s27
        %p268 = scmp.eq.s32.totalorder %s28, 0
        // Predicated region
        $region41: #{tpu_custom_call.1} parent=31 // pred_check
          %p269 = pneg %p268
        $region42: #{tpu_custom_call.1} parent=31 // pred_check_branch
          %271 = sbr.rel (%p269) target = $region44
        $region43: #{tpu_custom_call.1} parent=31 // pred_region
          %272 = vst [vmem:[#allocation2] sm:$0xff] 0.0
          %273 = vst [vmem:[#allocation2 + $0x8] sm:$0xff] 0.0
          %274 = vst [vmem:[#allocation2 + $0x10] sm:$0xff] 0.0
          %275 = vst [vmem:[#allocation2 + $0x18] sm:$0xff] 0.0
        $region44: #{tpu_custom_call.1} parent=31 // pred_fallthru
          _
        %v276 = vld [vmem:[#allocation2] sm:$0xff]
        %v277 = vld [vmem:[#allocation2 + $0x8] sm:$0xff]
        %v278 = vld [vmem:[#allocation2 + $0x10] sm:$0xff]
        %v279 = vld [vmem:[#allocation2 + $0x18] sm:$0xff]
        %v280 = vld [vmem:[#allocation3] sm:$0xff]
        %v281 = vld [vmem:[#allocation3 + $0x8] sm:$0xff]
        %v282 = vld [vmem:[#allocation3 + $0x10] sm:$0xff]
        %v283 = vld [vmem:[#allocation3 + $0x18] sm:$0xff]
        %v284 = vld [vmem:[%s230] sm:$0xff]
        %v285 = vld [vmem:[%s230 + $0x8] sm:$0xff]
        %v286 = vld [vmem:[%s230 + $0x10] sm:$0xff]
        %v287 = vld [vmem:[%s230 + $0x18] sm:$0xff]
        %v288 = vld [vmem:[%s230 + $0x20] sm:$0xff]
        %v289 = vld [vmem:[%s230 + $0x28] sm:$0xff]
        %v290 = vld [vmem:[%s230 + $0x30] sm:$0xff]
        %v291 = vld [vmem:[%s230 + $0x38] sm:$0xff]
        %v292 = vld [vmem:[%s230 + $0x40] sm:$0xff]
        %v293 = vld [vmem:[%s230 + $0x48] sm:$0xff]
        %v294 = vld [vmem:[%s230 + $0x50] sm:$0xff]
        %v295 = vld [vmem:[%s230 + $0x58] sm:$0xff]
        %v296 = vld [vmem:[%s230 + $0x60] sm:$0xff]
        %v297 = vld [vmem:[%s230 + $0x68] sm:$0xff]
        %v298 = vld [vmem:[%s230 + $0x70] sm:$0xff]
        %v299 = vld [vmem:[%s230 + $0x78] sm:$0xff]
        %v300 = vld [vmem:[%s230 + $0x80] sm:$0xff]
        %v301 = vld [vmem:[%s230 + $0x88] sm:$0xff]
        %v302 = vld [vmem:[%s230 + $0x90] sm:$0xff]
        %v303 = vld [vmem:[%s230 + $0x98] sm:$0xff]
        %v304 = vld [vmem:[%s230 + $0xa0] sm:$0xff]
        %v305 = vld [vmem:[%s230 + $0xa8] sm:$0xff]
        %v306 = vld [vmem:[%s230 + $0xb0] sm:$0xff]
        %v307 = vld [vmem:[%s230 + $0xb8] sm:$0xff]
        %v308 = vld [vmem:[%s230 + $0xc0] sm:$0xff]
        %v309 = vld [vmem:[%s230 + $0xc8] sm:$0xff]
        %v310 = vld [vmem:[%s230 + $0xd0] sm:$0xff]
        %v311 = vld [vmem:[%s230 + $0xd8] sm:$0xff]
        %v312 = vld [vmem:[%s230 + $0xe0] sm:$0xff]
        %v313 = vld [vmem:[%s230 + $0xe8] sm:$0xff]
        %v314 = vld [vmem:[%s230 + $0xf0] sm:$0xff]
        %v315 = vld [vmem:[%s230 + $0xf8] sm:$0xff]
        %v316 = vld [vmem:[%s230 + $0x100] sm:$0xff]
        %v317 = vld [vmem:[%s230 + $0x108] sm:$0xff]
        %v318 = vld [vmem:[%s230 + $0x110] sm:$0xff]
        %v319 = vld [vmem:[%s230 + $0x118] sm:$0xff]
        %v320 = vld [vmem:[%s230 + $0x120] sm:$0xff]
        %v321 = vld [vmem:[%s230 + $0x128] sm:$0xff]
        %v322 = vld [vmem:[%s230 + $0x130] sm:$0xff]
        %v323 = vld [vmem:[%s230 + $0x138] sm:$0xff]
        %v324 = vld [vmem:[%s230 + $0x140] sm:$0xff]
        %v325 = vld [vmem:[%s230 + $0x148] sm:$0xff]
        %v326 = vld [vmem:[%s230 + $0x150] sm:$0xff]
        %v327 = vld [vmem:[%s230 + $0x158] sm:$0xff]
        %v328 = vld [vmem:[%s230 + $0x160] sm:$0xff]
        %v329 = vld [vmem:[%s230 + $0x168] sm:$0xff]
        %v330 = vld [vmem:[%s230 + $0x170] sm:$0xff]
        %v331 = vld [vmem:[%s230 + $0x178] sm:$0xff]
        %v332 = vld [vmem:[%s230 + $0x180] sm:$0xff]
        %v333 = vld [vmem:[%s230 + $0x188] sm:$0xff]
        %v334 = vld [vmem:[%s230 + $0x190] sm:$0xff]
        %v335 = vld [vmem:[%s230 + $0x198] sm:$0xff]
        %v336 = vld [vmem:[%s230 + $0x1a0] sm:$0xff]
        %v337 = vld [vmem:[%s230 + $0x1a8] sm:$0xff]
        %v338 = vld [vmem:[%s230 + $0x1b0] sm:$0xff]
        %v339 = vld [vmem:[%s230 + $0x1b8] sm:$0xff]
        %v340 = vld [vmem:[%s230 + $0x1c0] sm:$0xff]
        %v341 = vld [vmem:[%s230 + $0x1c8] sm:$0xff]
        %v342 = vld [vmem:[%s230 + $0x1d0] sm:$0xff]
        %v343 = vld [vmem:[%s230 + $0x1d8] sm:$0xff]
        %v344 = vld [vmem:[%s230 + $0x1e0] sm:$0xff]
        %v345 = vld [vmem:[%s230 + $0x1e8] sm:$0xff]
        %v346 = vld [vmem:[%s230 + $0x1f0] sm:$0xff]
        %v347 = vld [vmem:[%s230 + $0x1f8] sm:$0xff]
        %348 = vmatprep.subr.mxu0 %v285
        %349 = vmatpush1.msra.mxu0 %v284
        %350 = vmatprep.subr.mxu0 %v287
        %351 = vmatpush1.msra.mxu0 %v286
        %352 = vmatprep.subr.mxu0 %v289
        %353 = vmatpush1.msra.mxu0 %v288
        %354 = vmatprep.subr.mxu0 %v291
        %355 = vmatpush1.msra.mxu0 %v290
        %356 = vmatprep.subr.mxu0 %v293
        %357 = vmatpush1.msra.mxu0 %v292
        %358 = vmatprep.subr.mxu0 %v295
        %359 = vmatpush1.msra.mxu0 %v294
        %360 = vmatprep.subr.mxu0 %v297
        %361 = vmatpush1.msra.mxu0 %v296
        %362 = vmatprep.subr.mxu0 %v299
        %363 = vmatpush1.msra.mxu0 %v298
        %364 = vmatprep.subr.mxu0 %v301
        %365 = vmatpush1.msra.mxu0 %v300
        %366 = vmatprep.subr.mxu0 %v303
        %367 = vmatpush1.msra.mxu0 %v302
        %368 = vmatprep.subr.mxu0 %v305
        %369 = vmatpush1.msra.mxu0 %v304
        %370 = vmatprep.subr.mxu0 %v307
        %371 = vmatpush1.msra.mxu0 %v306
        %372 = vmatprep.subr.mxu0 %v309
        %373 = vmatpush1.msra.mxu0 %v308
        %374 = vmatprep.subr.mxu0 %v311
        %375 = vmatpush1.msra.mxu0 %v310
        %376 = vmatprep.subr.mxu0 %v313
        %377 = vmatpush1.msra.mxu0 %v312
        %378 = vmatprep.subr.mxu0 %v315
        %379 = vmatpush1.msra.mxu0 %v314
        %380 = vmatprep.subr.mxu0 %v317
        %381 = vmatpush1.msra.mxu0 %v316
        %382 = vmatprep.subr.mxu0 %v319
        %383 = vmatpush1.msra.mxu0 %v318
        %384 = vmatprep.subr.mxu0 %v321
        %385 = vmatpush1.msra.mxu0 %v320
        %386 = vmatprep.subr.mxu0 %v323
        %387 = vmatpush1.msra.mxu0 %v322
        %388 = vmatprep.subr.mxu0 %v325
        %389 = vmatpush1.msra.mxu0 %v324
        %390 = vmatprep.subr.mxu0 %v327
        %391 = vmatpush1.msra.mxu0 %v326
        %392 = vmatprep.subr.mxu0 %v329
        %393 = vmatpush1.msra.mxu0 %v328
        %394 = vmatprep.subr.mxu0 %v331
        %395 = vmatpush1.msra.mxu0 %v330
        %396 = vmatprep.subr.mxu0 %v333
        %397 = vmatpush1.msra.mxu0 %v332
        %398 = vmatprep.subr.mxu0 %v335
        %399 = vmatpush1.msra.mxu0 %v334
        %400 = vmatprep.subr.mxu0 %v337
        %401 = vmatpush1.msra.mxu0 %v336
        %402 = vmatprep.subr.mxu0 %v339
        %403 = vmatpush1.msra.mxu0 %v338
        %404 = vmatprep.subr.mxu0 %v341
        %405 = vmatpush1.msra.mxu0 %v340
        %406 = vmatprep.subr.mxu0 %v343
        %407 = vmatpush1.msra.mxu0 %v342
        %408 = vmatprep.subr.mxu0 %v345
        %409 = vmatpush1.msra.mxu0 %v344
        %410 = vmatprep.subr.mxu0 %v347
        %411 = vmatpush1.msra.mxu0 %v346
        %412 = vmatprep.mubr.f32.mxu0 %v281
        %413 = vmatmul.mubr.f32.gmra.mrb[0].mxu0 %v280
        %v414 = vpop.f32.mrb[0].mxu0
        %v415 = vadd.f32 0.0, %v414
        %v416 = vpop.f32.mrb[0].mxu0
        %v417 = vadd.f32 0.0, %v416
        %418 = vmatprep.mubr.f32.mxu0 %v283
        %419 = vmatmul.mubr.f32.gmra.mrb[0].mxu0 %v282
        %v420 = vpop.f32.mrb[0].mxu0
        %v421 = vadd.f32 0.0, %v420
        %v422 = vpop.f32.mrb[0].mxu0
        %v423 = vadd.f32 0.0, %v422
        %424 = vdwg.mxu0
        %v425 = vadd.f32 %v276, %v415
        %v426 = vadd.f32 %v277, %v417
        %v427 = vadd.f32 %v278, %v421
        %v428 = vadd.f32 %v279, %v423
        %429 = vst [vmem:[#allocation2] sm:$0xff] %v425
        %430 = vst [vmem:[#allocation2 + $0x8] sm:$0xff] %v426
        %431 = vst [vmem:[#allocation2 + $0x10] sm:$0xff] %v427
        %432 = vst [vmem:[#allocation2 + $0x18] sm:$0xff] %v428
        // Predicated region
        $region45: #{tpu_custom_call.1} parent=31 // pred_check
          %p433 = pneg %p268
        $region46: #{tpu_custom_call.1} parent=31 // pred_check_branch
          %435 = sbr.rel (%p433) target = $region48
        $region47: #{tpu_custom_call.1} parent=31 // pred_region
          %v436 = vld [vmem:[#allocation2] sm:$0xff]
          %v437 = vld [vmem:[#allocation2 + $0x8] sm:$0xff]
          %v438 = vld [vmem:[#allocation2 + $0x10] sm:$0xff]
          %v439 = vld [vmem:[#allocation2 + $0x18] sm:$0xff]
          %v440 = vld [vmem:[%s264] sm:$0x3]
          %v442 = vlaneseq
          %v443 = vshrl.u32 %v442, 7
          %v444 = vsub.s32 0, %v443
          %v445 = vrot.slane %v440, %v444
          %v446 = vlaneseq
          %v447 = vshrl.u32 %v446, 7
          %v448 = vsub.s32 1, %v447
          %v449 = vrot.slane %v440, %v448
          %v452 = vadd.f32 %v436, %v445
          %v453 = vadd.f32 %v437, %v449
          %v454 = vadd.f32 %v438, %v445
          %v455 = vadd.f32 %v439, %v449
          %456 = vst [vmem:[%s256] sm:$0xff] %v452
          %457 = vst [vmem:[%s256 + $0x8] sm:$0xff] %v453
          %458 = vst [vmem:[%s256 + $0x10] sm:$0xff] %v454
          %459 = vst [vmem:[%s256 + $0x18] sm:$0xff] %v455
        $region48: #{tpu_custom_call.1} parent=31 // pred_fallthru
          _
        %s460 = sand.u32 %s132, 1
        %s461 = scalar_lea.sflag [#allocation5], %s460
        %s462 = sand.u32 %s132, 1
        %s463 = smul.addr %s462, 32
        %s464 = scalar_lea.vmem [#allocation8], %s463
        // Predicated region
        $region49: #{tpu_custom_call.1} parent=31 // pred_check
          %p465 = pneg %p142
        $region50: #{tpu_custom_call.1} parent=31 // pred_check_branch
          %467 = sbr.rel (%p465) target = $region52
        $region51: #{tpu_custom_call.1} parent=31 // pred_region
          %s468 = smul.u32 2, %s26
          %s469 = smul.u32 2, %s27
          %s471 = ssub.s32 512, 512
          %472 = vsyncadd %s461, %s471
          %s473 = smul.addr %s468, 4
          %s474 = sadd.s32 %s469, %s473
          %s475 = smul.addr %s474, 128
          %s476 = scalar_lea.hbm %s3, %s475
          %s477 = sshll.u32 %s464, 4
          %s478 = int_to_ptr.vmem [resolvable:$true] %s477
          %483 = dma.vmem_to_hbm [thread:$0]  %s478, 512, %s476, %s461, 256, 512, 16
        $region52: #{tpu_custom_call.1} parent=31 // pred_fallthru
          _
      $region32: #{tpu_custom_call.1} parent=5 // pred_fallthru
        _
      %p484 = scmp.le.s32.totalorder 2, %s16
      // Predicated region
      $region53: #{tpu_custom_call.1} parent=5 // pred_check
        %p485 = pneg %p484
      $region54: #{tpu_custom_call.1} parent=5 // pred_check_branch
        %487 = sbr.rel (%p485) target = $region56
      $region55: #{tpu_custom_call.1} parent=5 // pred_region
        %s488 = ssub.s32 %s16, 2
        // Predicated region
        $region57: #{tpu_custom_call.1} parent=55 // pred_check
          %p489 = pneg %p148
        $region58: #{tpu_custom_call.1} parent=55 // pred_check_branch
          %491 = sbr.rel (%p489) target = $region60
        $region59: #{tpu_custom_call.1} parent=55 // pred_region
          %s492 = sand.u32 %s133, 1
          %s493 = scalar_lea.sflag [#allocation5], %s492
          %s494 = sand.u32 %s133, 1
          %s495 = smul.addr %s494, 32
          %s496 = scalar_lea.vmem [#allocation8], %s495
          %497 = dma.done %s493, 512
        $region60: #{tpu_custom_call.1} parent=55 // pred_fallthru
          _
      $region56: #{tpu_custom_call.1} parent=5 // pred_fallthru
        _
    $region6: #{tpu_custom_call.1} parent=1 // loop_footer
      %s20 = sadd.s32 1, %s16
    $region7: #{tpu_custom_call.1} parent=1 // loop_footer_branch
      %15 = sbr.rel target = $region3
    $region8: #{tpu_custom_call.1} parent=1 // loop_exit
      _
    %498 = vsyncpa [#allocation4], 1
    %s499 = scalar_lea.sflag [#allocation4], 1
    %500 = vsyncpa %s499, 1
    %501 = vsyncpa [#allocation7], 1
    %s502 = scalar_lea.sflag [#allocation7], 1
    %503 = vsyncpa %s502, 1
    %504 = vsyncpa [#allocation5], 1
    %s505 = scalar_lea.sflag [#allocation5], 1
    %506 = vsyncpa %s505, 1

</llo_original>
